<compile_context>
chip_gen: v6e
topology: v6e:2x2x1
jax: 0.10.0
libtpu: 0.0.40
codegen_flags: <defaults>
</compile_context>

<pallas_src>
import jax
import jax.numpy as jnp
from jax.experimental import pallas as pl
from jax.experimental.pallas import tpu as pltpu

EMBEDDING_DIM = 20
MAX_LENGTH = 14
NUM_STOCKS = 6
BATCH = 4


def fused_head_kernel(x_ref, w_ref, b_ref, o_ref):
    # x_ref: (TB, L*S)   w_ref: (L*S, S)   b_ref: (1, S)   o_ref: (TB, S)
    logits = jnp.dot(x_ref[...], w_ref[...],
                     preferred_element_type=jnp.float32) + b_ref[...]
    # numerically stabilized softmax along the last dim (rows are independent,
    # so garbage rows of a partial edge block cannot contaminate valid rows).
    m = jnp.max(logits, axis=-1, keepdims=True)
    e = jnp.exp(logits - m)
    denom = jnp.sum(e, axis=-1, keepdims=True)
    o_ref[...] = (e * pl.reciprocal(denom, approx=True)).astype(o_ref.dtype)


def fuse_head_params(w1, b1, w2, b2, max_length):
    """Fold Linear(S->E) and Linear(L*E->S) into one (L*S, S) weight + (S,) bias.

    logits[b] = b2 + b1 @ sum_l W2r[l] + sum_l x[b, l, :] @ (W1 @ W2r[l])
    Compute this ONCE (weights are static across calls) and reuse.
    """
    S, E = w1.shape
    w2r = w2.reshape(max_length, E, S)                                  # (L, E, S)
    w_eff = jnp.einsum("ie,leo->lio", w1, w2r).reshape(max_length * S, S)
    b_eff = (b2 + b1 @ jnp.sum(w2r, axis=0)).reshape(1, S)
    return w_eff, b_eff


def _pick_batch_tile(B, block_b):
    """Balance the batch tile: at most `block_b` rows/step, multiple of 8,
    tail block wastes <= 7 rows, and >= 2 grid steps when the batch allows
    (so both v7x TensorCores get work)."""
    n_blocks = pl.cdiv(B, block_b)
    if B >= 16:
        n_blocks = max(n_blocks, 2)
    tb = ((pl.cdiv(B, n_blocks) + 7) // 8) * 8
    return tb


def transformer_model2_forward(x, w_eff, b_eff, *, block_b=8192, use_bf16=False):
    """x: (B, L, S) float32.  w_eff: (L*S, S), b_eff: (1, S) from fuse_head_params.

    Returns softmax probabilities (B, S) in float32.
    """
    B, L, S = x.shape

    # Flatten x so the kernel is a single matmul per batch block.  The (l, i)
    # order of x.reshape matches w_eff.reshape(L*S, S) built from 'ie,leo->lio'.
    x_flat = x.reshape(B, L * S)                                        # (B, L*S)

    if use_bf16:
        # Halves the dominant HBM read traffic; accumulation stays fp32 in-kernel.
        x_flat = x_flat.astype(jnp.bfloat16)
        w_eff = w_eff.astype(jnp.bfloat16)

    tb = _pick_batch_tile(B, block_b)
    grid = (pl.cdiv(B, tb),)   # no padding: Pallas handles the partial edge block

    out = pl.pallas_call(
        fused_head_kernel,
        out_shape=jax.ShapeDtypeStruct((B, S), jnp.float32),
        grid=grid,
        in_specs=[
            pl.BlockSpec((tb, L * S), lambda i: (i, 0)),   # x block (streamed)
            pl.BlockSpec((L * S, S), lambda i: (0, 0)),    # fused weight (resident)
            pl.BlockSpec((1, S), lambda i: (0, 0)),        # fused bias (resident)
        ],
        out_specs=pl.BlockSpec((tb, S), lambda i: (i, 0)),
        compiler_params=pltpu.CompilerParams(
            dimension_semantics=("parallel",)),
    )(x_flat, w_eff, b_eff)

    return out


def reference_forward(x, w1, b1, w2, b2):
    B = x.shape[0]
    emb = jnp.einsum("bls,se->ble", x, w1) + b1          # (B, L, E)
    flat = emb.reshape(B, -1)                            # (B, L*E)
    logits = flat @ w2 + b2                              # (B, S)
    return jax.nn.softmax(logits, axis=-1)


if __name__ == "__main__":
    key = jax.random.PRNGKey(0)
    kx, k1, k2, k3, k4 = jax.random.split(key, 5)

    B, L, S, E = BATCH, MAX_LENGTH, NUM_STOCKS, EMBEDDING_DIM

    x = jax.random.normal(kx, (B, L, S), dtype=jnp.float32)

    # Parameters stored as (in, out), i.e. transposed vs PyTorch's (out, in).
    w1 = jax.random.normal(k1, (S, E), dtype=jnp.float32) * (1.0 / S ** 0.5)
    b1 = jax.random.normal(k2, (E,), dtype=jnp.float32) * 0.01
    w2 = jax.random.normal(k3, (E * L, S), dtype=jnp.float32) * (1.0 / (E * L) ** 0.5)
    b2 = jax.random.normal(k4, (S,), dtype=jnp.float32) * 0.01

    # Fuse the two linears once (static weights), reuse across forward calls.
    w_eff, b_eff = fuse_head_params(w1, b1, w2, b2, L)

    out = transformer_model2_forward(x, w_eff, b_eff)
    out = jax.block_until_ready(out)

    ref = reference_forward(x, w1, b1, w2, b2)
    assert out.shape == (B, S)
    # approx=True reciprocal in the kernel -> slightly looser tolerance than fp32-exact.
    assert jnp.allclose(out, ref, atol=2e-3, rtol=2e-3), "mismatch vs JAX reference"

    print("KERNEL_OK")
</pallas_src>

<mosaic_0001>
module attributes {stable_mosaic.version = 11 : i64} {
  func.func @fused_head_kernel(%arg0: i32, %arg1: memref<8x84xf32, #tpu.memory_space<vmem>>, %arg2: memref<84x6xf32, #tpu.memory_space<vmem>>, %arg3: memref<1x6xf32, #tpu.memory_space<vmem>>, %arg4: memref<8x6xf32, #tpu.memory_space<vmem>>) attributes {dimension_semantics = [#tpu.dimension_semantics<parallel>], iteration_bounds = array<i64: 1>, scalar_prefetch = 0 : i64, scratch_operands = 0 : i64, tpu.core_type = #tpu.core_type<tc>, window_params = [{transform_indices = @transform_0, window_bounds = array<i64: 8, 84>}, {pipeline_mode = #tpu.pipeline_mode<synchronous>, transform_indices = @transform_1, window_bounds = array<i64: 84, 6>}, {pipeline_mode = #tpu.pipeline_mode<synchronous>, transform_indices = @transform_2, window_bounds = array<i64: 1, 6>}, {transform_indices = @transform_3, window_bounds = array<i64: 8, 6>}]} {
    %c0 = arith.constant 0 : index
    %c0_0 = arith.constant 0 : index
    %0 = vector.load %arg1[%c0, %c0_0] : memref<8x84xf32, #tpu.memory_space<vmem>>, vector<8x84xf32>
    %c0_1 = arith.constant 0 : index
    %c0_2 = arith.constant 0 : index
    %1 = vector.load %arg2[%c0_1, %c0_2] : memref<84x6xf32, #tpu.memory_space<vmem>>, vector<84x6xf32>
    %cst = arith.constant dense<0.000000e+00> : vector<8x6xf32>
    %2 = tpu.matmul %0, %1, %cst {dimension_numbers = #tpu.dot_dimension_numbers<[1], [0], [0], [1], [0, 0, 1, 1], [], []>} : vector<8x84xf32>, vector<84x6xf32>, vector<8x6xf32> -> vector<8x6xf32>
    %c0_3 = arith.constant 0 : index
    %c0_4 = arith.constant 0 : index
    %3 = vector.load %arg3[%c0_3, %c0_4] : memref<1x6xf32, #tpu.memory_space<vmem>>, vector<1x6xf32>
    %4 = vector.broadcast %3 : vector<1x6xf32> to vector<8x6xf32>
    %5 = arith.addf %2, %4 : vector<8x6xf32>
    %cst_5 = arith.constant dense<0xFF800000> : vector<8xf32>
    %6 = vector.multi_reduction <maximumf>, %5, %cst_5 [1] : vector<8x6xf32> to vector<8xf32>
    %7 = vector.shape_cast %6 : vector<8xf32> to vector<8x1xf32>
    %8 = vector.broadcast %7 : vector<8x1xf32> to vector<8x6xf32>
    %9 = arith.subf %5, %8 : vector<8x6xf32>
    %10 = math.exp %9 : vector<8x6xf32>
    %cst_6 = arith.constant dense<0.000000e+00> : vector<8xf32>
    %11 = vector.multi_reduction <add>, %10, %cst_6 [1] : vector<8x6xf32> to vector<8xf32>
    %12 = vector.shape_cast %11 : vector<8xf32> to vector<8x1xf32>
    %13 = tpu.reciprocal %12 {approx = true} : vector<8x1xf32> -> vector<8x1xf32>
    %14 = vector.broadcast %13 : vector<8x1xf32> to vector<8x6xf32>
    %15 = arith.mulf %10, %14 : vector<8x6xf32>
    %c0_7 = arith.constant 0 : index
    %c0_8 = arith.constant 0 : index
    %16 = vector.load %arg4[%c0_7, %c0_8] : memref<8x6xf32, #tpu.memory_space<vmem>>, vector<8x6xf32>
    tpu.vector_store %arg4[%c0_7, %c0_8], %15 {strides = array<i32>} : memref<8x6xf32, #tpu.memory_space<vmem>>, vector<8x6xf32>,
    return
  }
  func.func @transform_0(%arg0: i32) -> (i32, i32) {
    %c0_i32 = arith.constant 0 : i32
    %c0_i32_0 = arith.constant 0 : i32
    return %arg0, %c0_i32 : i32, i32
  }
  func.func @transform_1(%arg0: i32) -> (i32, i32) {
    %c0_i32 = arith.constant 0 : i32
    %c0_i32_0 = arith.constant 0 : i32
    %c0_i32_1 = arith.constant 0 : i32
    return %c0_i32, %c0_i32_0 : i32, i32
  }
  func.func @transform_2(%arg0: i32) -> (i32, i32) {
    %c0_i32 = arith.constant 0 : i32
    %c0_i32_0 = arith.constant 0 : i32
    %c0_i32_1 = arith.constant 0 : i32
    return %c0_i32, %c0_i32_0 : i32, i32
  }
  func.func @transform_3(%arg0: i32) -> (i32, i32) {
    %c0_i32 = arith.constant 0 : i32
    %c0_i32_0 = arith.constant 0 : i32
    return %arg0, %c0_i32 : i32, i32
  }
}

</mosaic_0001>

<llo_original>
// kernel: tpu_custom_call.1
$region0: #{tpu_custom_call.1}
  #allocation0 [shape = 'u32[]', space=smem, size = 0x4, offset = 0x4, fixed_abs, tag = 'smem constant byte address 0x4 - core index']
  #allocation1 [shape = 'u32[144,128]{1,0:T(1,128)}', space=vmem, size = 0x12000, scoped, tag = 'internal scratch']
  %s0 = inlined_call_operand.vmem [shape: f32[4,84], index: 0, kind: input, shape index: {}]
  %s1 = inlined_call_operand.vmem [shape: f32[84,6], index: 1, kind: input, shape index: {}]
  %s2 = inlined_call_operand.vmem [shape: f32[1,6], index: 2, kind: input, shape index: {}]
  %s3 = inlined_call_operand.hbm [shape: f32[4,6], index: 3, kind: output, shape index: {}]
  %s4 = sld [smem:[#allocation0]]
  $region22: #{tpu_custom_call.1} parent=0
    _
  %s6 = ssub.s32 1, %s4
  %s7 = scalar_select 0, %s6, %s4
  $region1: #{tpu_custom_call.1} parent=0
    #allocation2 [shape = 'u8[4096]{0}', space=vmem, size = 0x1000, scoped, tag = 'output window, operand 0, single buffered']
    #allocation3 [shape = 's32[1]{0}', space=sflag, size = 0x4, scoped, tag = 'scoped memory for tpu_custom_call.1']
    %8 = vsyncpa [#allocation3], 0
    // Predicated region
    $region2: #{tpu_custom_call.1} parent=1 // pred_check
      _
    $region3: #{tpu_custom_call.1} parent=1 // pred_check_branch
      %10 = sbr.rel (0) target = $region5
    $region4: #{tpu_custom_call.1} parent=1 // pred_region
      _
    $region5: #{tpu_custom_call.1} parent=1 // pred_fallthru
      _
    // Predicated region
    $region6: #{tpu_custom_call.1} parent=1 // pred_check
      _
    $region7: #{tpu_custom_call.1} parent=1 // pred_check_branch
      %12 = sbr.rel (0) target = $region9
    $region8: #{tpu_custom_call.1} parent=1 // pred_region
      _
    $region9: #{tpu_custom_call.1} parent=1 // pred_fallthru
      _
    // Predicated region
    $region10: #{tpu_custom_call.1} parent=1 // pred_check
      _
    $region11: #{tpu_custom_call.1} parent=1 // pred_check_branch
      %14 = sbr.rel (0) target = $region13
    $region12: #{tpu_custom_call.1} parent=1 // pred_region
      _
    $region13: #{tpu_custom_call.1} parent=1 // pred_fallthru
      _
    %v15 = vld [vmem:[%s0] sm:$0xff]
    %v16 = vld [vmem:[%s1] sm:$0xff]
    %v17 = vld [vmem:[%s1 + $0x8] sm:$0xff]
    %v18 = vld [vmem:[%s1 + $0x10] sm:$0xff]
    %v19 = vld [vmem:[%s1 + $0x18] sm:$0xff]
    %v20 = vld [vmem:[%s1 + $0x20] sm:$0xff]
    %v21 = vld [vmem:[%s1 + $0x28] sm:$0xff]
    %v22 = vld [vmem:[%s1 + $0x30] sm:$0xff]
    %v23 = vld [vmem:[%s1 + $0x38] sm:$0xff]
    %v24 = vld [vmem:[%s1 + $0x40] sm:$0xff]
    %v25 = vld [vmem:[%s1 + $0x48] sm:$0xff]
    %v26 = vld [vmem:[%s1 + $0x50] sm:$0xf]
    %v27 = vld [vmem:[%s2] sm:$0x1]
    %v29 = vlaneseq
    %v30 = vshrl.u32 %v29, 7
    %v31 = vsub.s32 0, %v30
    %v32 = vrot.slane %v27, %v31
    %vm34 = vcmask 687104
    %v36 = vsel %vm34, %v15, 0
    %vm38 = vcmask 1043456
    %v40 = vsel %vm38, %v26, 0
    %42 = vmatprep.subr.mxu0 0.0
    %43 = vmatpush1.msra.mxu0 0.0
    %44 = vmatprep.subr.mxu0 0.0
    %45 = vmatpush1.msra.mxu0 0.0
    %46 = vmatprep.subr.mxu0 0.0
    %47 = vmatpush1.msra.mxu0 0.0
    %48 = vmatprep.subr.mxu0 0.0
    %49 = vmatpush1.msra.mxu0 0.0
    %50 = vmatprep.subr.mxu0 0.0
    %51 = vmatpush1.msra.mxu0 0.0
    %52 = vmatprep.subr.mxu0 0.0
    %53 = vmatpush1.msra.mxu0 %v40
    %54 = vmatprep.subr.mxu0 0.0
    %55 = vmatpush1.msra.mxu0 %v25
    %56 = vmatprep.subr.mxu0 0.0
    %57 = vmatpush1.msra.mxu0 %v24
    %58 = vmatprep.subr.mxu0 0.0
    %59 = vmatpush1.msra.mxu0 %v23
    %60 = vmatprep.subr.mxu0 0.0
    %61 = vmatpush1.msra.mxu0 %v22
    %62 = vmatprep.subr.mxu0 0.0
    %63 = vmatpush1.msra.mxu0 %v21
    %64 = vmatprep.subr.mxu0 0.0
    %65 = vmatpush1.msra.mxu0 %v20
    %66 = vmatprep.subr.mxu0 0.0
    %67 = vmatpush1.msra.mxu0 %v19
    %68 = vmatprep.subr.mxu0 0.0
    %69 = vmatpush1.msra.mxu0 %v18
    %70 = vmatprep.subr.mxu0 0.0
    %71 = vmatpush1.msra.mxu0 %v17
    %72 = vmatprep.subr.mxu0 0.0
    %73 = vmatpush1.msra.mxu0 %v16
    %74 = vmatprep.subr.mxu0 0.0
    %75 = vmatpush2.msra.mxu0 0.0
    %76 = vmatprep.subr.mxu0 0.0
    %77 = vmatpush2.msra.mxu0 0.0
    %78 = vmatprep.subr.mxu0 0.0
    %79 = vmatpush2.msra.mxu0 0.0
    %80 = vmatprep.subr.mxu0 0.0
    %81 = vmatpush2.msra.mxu0 0.0
    %82 = vmatprep.subr.mxu0 0.0
    %83 = vmatpush2.msra.mxu0 0.0
    %84 = vmatprep.subr.mxu0 0.0
    %85 = vmatpush2.msra.mxu0 0.0
    %86 = vmatprep.subr.mxu0 0.0
    %87 = vmatpush2.msra.mxu0 0.0
    %88 = vmatprep.subr.mxu0 0.0
    %89 = vmatpush2.msra.mxu0 0.0
    %90 = vmatprep.subr.mxu0 0.0
    %91 = vmatpush2.msra.mxu0 0.0
    %92 = vmatprep.subr.mxu0 0.0
    %93 = vmatpush2.msra.mxu0 0.0
    %94 = vmatprep.subr.mxu0 0.0
    %95 = vmatpush2.msra.mxu0 0.0
    %96 = vmatprep.subr.mxu0 0.0
    %97 = vmatpush2.msra.mxu0 0.0
    %98 = vmatprep.subr.mxu0 0.0
    %99 = vmatpush2.msra.mxu0 0.0
    %100 = vmatprep.subr.mxu0 0.0
    %101 = vmatpush2.msra.mxu0 0.0
    %102 = vmatprep.subr.mxu0 0.0
    %103 = vmatpush2.msra.mxu0 0.0
    %104 = vmatprep.subr.mxu0 0.0
    %105 = vmatpush2.msra.mxu0 0.0
    %106 = vmatprep.mubr.f32.mxu0 0.0
    %107 = vmatmul.mubr.f32.gmra.mxu0 %v36
    %v108 = vpop.f32.mrf.mxu0
    %v109 = vadd.f32 %v32, %v108
    %v110 = vpop.f32.mrf.mxu0
    %111 = vdwg.mxu0
    %vm112 = vcmask 48128
    %v113 = vsel %vm112, %v109, -inf
    %114 = vmax.xlane.f32.xlu0 %v113
    %v115 = vpop.xlane.xlu0 %114
    %v116 = vsub.f32 %v109, %v115
    %v117 = vmul.f32 %v116, 1.442695
    %v118 = vpow.pop %v117
    %v119 = vsel %vm112, %v118, 0.0
    %120 = vadd.xlane.f32.xlu0 %v119
    %v121 = vpop.xlane.xlu0 %120
    %v122 = vrcp.pop %v121
    %v123 = vmul.f32 %v118, %v122
    %124 = vst.msk [vmem:[#allocation2] sm:$0xff] %vm112, %v123
    // Predicated region
    $region14: #{tpu_custom_call.1} parent=1 // pred_check
      _
    $region15: #{tpu_custom_call.1} parent=1 // pred_check_branch
      %126 = sbr.rel (0) target = $region17
    $region16: #{tpu_custom_call.1} parent=1 // pred_region
      %s128 = ssub.s32 128, 64
      %129 = vsyncadd [#allocation3], %s128
      %s130 = sshll.u32 [#allocation2], 4
      %s131 = int_to_ptr.vmem [resolvable:$true] %s130
      %136 = dma.vmem_to_hbm [thread:$0]  %s131, 64, %s3, [#allocation3], 64, 64, 4
    $region17: #{tpu_custom_call.1} parent=1 // pred_fallthru
      _
    // Predicated region
    $region18: #{tpu_custom_call.1} parent=1 // pred_check
      _
    $region19: #{tpu_custom_call.1} parent=1 // pred_check_branch
      %138 = sbr.rel (0) target = $region21
    $region20: #{tpu_custom_call.1} parent=1 // pred_region
      %139 = dma.done [#allocation3], 128
    $region21: #{tpu_custom_call.1} parent=1 // pred_fallthru
      _
    %140 = vsyncpa [#allocation3], 1

</llo_original>
